<compile_context>
chip_gen: v6e
topology: v6e:2x2x1
jax: 0.10.0
libtpu: 0.0.40
codegen_flags: <defaults>
</compile_context>

<pallas_src>
import functools
import itertools

import numpy as np
import jax
import jax.numpy as jnp
from jax.experimental import pallas as pl
from jax.experimental.pallas import tpu as pltpu


def _matcher_cost_kernel(logits_ref, onehot_ref, obox_ref, tcen_ref, tcor_ref,
                         cost_ref, *, class_w, bbox_w, giou_w):
    """One row-tile of the DETR matcher cost matrix.

    logits_ref: (tr, NC)   prediction class logits
    onehot_ref: (NC, Tp)   one-hot(target class) columns (padded cols are zero)
    obox_ref:   (tr, 4)    predicted boxes, center format (cx, cy, w, h)
    tcen_ref:   (4, Tp)    target boxes, center format, transposed
    tcor_ref:   (4, Tp)    target boxes, corner format (x0, y0, x1, y1), transposed
    cost_ref:   (tr, Tp)   output cost tile
    """
    # ---- class cost: -softmax(logits)[:, target_ids] via one-hot matmul ----
    lg = logits_ref[...]
    lg = lg - jnp.max(lg, axis=-1, keepdims=True)
    e = jnp.exp(lg)
    prob = e / jnp.sum(e, axis=-1, keepdims=True)
    cls_cost = -jnp.dot(prob, onehot_ref[...],
                        preferred_element_type=jnp.float32)        # (tr, Tp)

    # ---- box coordinates ----
    ob = obox_ref[...]                                             # (tr, 4)
    ocx, ocy = ob[:, 0:1], ob[:, 1:2]
    ow, oh = ob[:, 2:3], ob[:, 3:4]

    tc = tcen_ref[...]                                             # (4, Tp)
    tcx, tcy = tc[0:1, :], tc[1:2, :]
    tw, th = tc[2:3, :], tc[3:4, :]

    # ---- bbox cost: pairwise L1 (torch.cdist, p=1) on center format ----
    l1_cost = (jnp.abs(ocx - tcx) + jnp.abs(ocy - tcy)
               + jnp.abs(ow - tw) + jnp.abs(oh - th))              # (tr, Tp)

    # ---- giou cost on corner format ----
    ox0 = ocx - 0.5 * ow
    oy0 = ocy - 0.5 * oh
    ox1 = ocx + 0.5 * ow
    oy1 = ocy + 0.5 * oh

    txy = tcor_ref[...]                                            # (4, Tp)
    tx0, ty0, tx1, ty1 = txy[0:1, :], txy[1:2, :], txy[2:3, :], txy[3:4, :]

    area_o = (ox1 - ox0) * (oy1 - oy0)                             # (tr, 1)
    area_t = (tx1 - tx0) * (ty1 - ty0)                             # (1, Tp)

    iw = jnp.maximum(jnp.minimum(ox1, tx1) - jnp.maximum(ox0, tx0), 0.0)
    ih = jnp.maximum(jnp.minimum(oy1, ty1) - jnp.maximum(oy0, ty0), 0.0)
    inter = iw * ih                                                # (tr, Tp)
    union = area_o + area_t - inter
    iou = inter / union

    ew = jnp.maximum(jnp.maximum(ox1, tx1) - jnp.minimum(ox0, tx0), 0.0)
    eh = jnp.maximum(jnp.maximum(oy1, ty1) - jnp.minimum(oy0, ty0), 0.0)
    area_e = ew * eh
    giou = iou - (area_e - union) / area_e
    giou_cost = -giou

    cost_ref[...] = bbox_w * l1_cost + class_w * cls_cost + giou_w * giou_cost


def detr_hungarian_cost_matrix(logits, pred_boxes, target_ids, target_bbox,
                               *, class_cost=1.0, bbox_cost=1.0, giou_cost=1.0,
                               row_tile=8):
    """Returns the (B, Q, T) matcher cost matrix (computed with Pallas)."""
    B, Q, NC = logits.shape
    BQ = B * Q
    T = int(target_bbox.shape[0])

    out_logits = logits.reshape(BQ, NC).astype(jnp.float32)
    out_bbox = pred_boxes.reshape(BQ, 4).astype(jnp.float32)

    # Lane-dense target/column padding (multiple of 128) and row padding to
    # a multiple of the row tile (no full-extent fallback).
    Tp = 128 * pl.cdiv(max(T, 1), 128)
    BQp = row_tile * pl.cdiv(BQ, row_tile)

    # One-hot class table (NC, Tp); padded target columns are all-zero.
    onehot = (jnp.arange(NC, dtype=target_ids.dtype)[:, None]
              == target_ids[None, :]).astype(jnp.float32)
    onehot = jnp.pad(onehot, ((0, 0), (0, Tp - T)))

    # Pad targets with dummy unit boxes so padded columns never divide by zero.
    dummy = jnp.tile(jnp.array([[0.5, 0.5, 1.0, 1.0]], jnp.float32), (Tp - T, 1))
    tb = jnp.concatenate([target_bbox.astype(jnp.float32), dummy], axis=0)
    tcen = tb.T                                                    # (4, Tp)
    tcor = jnp.stack([tb[:, 0] - 0.5 * tb[:, 2],
                      tb[:, 1] - 0.5 * tb[:, 3],
                      tb[:, 0] + 0.5 * tb[:, 2],
                      tb[:, 1] + 0.5 * tb[:, 3]], axis=0)          # (4, Tp)

    out_logits = jnp.pad(out_logits, ((0, BQp - BQ), (0, 0)))
    out_bbox = jnp.pad(out_bbox, ((0, BQp - BQ), (0, 0)))

    kernel = functools.partial(_matcher_cost_kernel,
                               class_w=float(class_cost),
                               bbox_w=float(bbox_cost),
                               giou_w=float(giou_cost))

    cost = pl.pallas_call(
        kernel,
        out_shape=jax.ShapeDtypeStruct((BQp, Tp), jnp.float32),
        grid_spec=pltpu.PrefetchScalarGridSpec(
            num_scalar_prefetch=0,
            grid=(BQp // row_tile,),
            in_specs=[
                pl.BlockSpec((row_tile, NC), lambda i: (i, 0)),   # logits rows
                pl.BlockSpec((NC, Tp), lambda i: (0, 0)),         # one-hot (resident)
                pl.BlockSpec((row_tile, 4), lambda i: (i, 0)),    # pred boxes rows
                pl.BlockSpec((4, Tp), lambda i: (0, 0)),          # target center (resident)
                pl.BlockSpec((4, Tp), lambda i: (0, 0)),          # target corners (resident)
            ],
            out_specs=pl.BlockSpec((row_tile, Tp), lambda i: (i, 0)),
        ),
        compiler_params=pltpu.CompilerParams(
            dimension_semantics=("parallel",)),
    )(out_logits, onehot, out_bbox, tcen, tcor)

    return cost[:BQ, :T].reshape(B, Q, T)


def _brute_force_lsa(cost):
    """Exact minimal-cost 1-to-1 assignment for tiny matrices (demo sizes)."""
    # TODO(synk): scipy.optimize.linear_sum_assignment (Hungarian) is a sequential,
    # data-dependent host-side step in DETR with no Pallas equivalent; this exact
    # brute-force solver stands in for it at demo scale.
    c = np.asarray(cost, dtype=np.float64)
    n_rows, n_cols = c.shape
    assert n_cols <= n_rows, "expects num_queries >= num_target_boxes"
    best_sum, best_rows = None, None
    cols = list(range(n_cols))
    for rows in itertools.permutations(range(n_rows), n_cols):
        s = float(c[list(rows), cols].sum())
        if best_sum is None or s < best_sum:
            best_sum, best_rows = s, rows
    row_idx = np.asarray(best_rows, dtype=np.int64)
    col_idx = np.arange(n_cols, dtype=np.int64)
    order = np.argsort(row_idx)
    return row_idx[order], col_idx[order]


def detr_hungarian_matcher(logits, pred_boxes, targets, *, class_cost=1.0,
                           bbox_cost=1.0, giou_cost=1.0):
    """Full matcher forward: Pallas cost matrix + host-side assignment."""
    target_ids = jnp.concatenate([t["class_labels"] for t in targets])
    target_bbox = jnp.concatenate([t["boxes"] for t in targets])
    cost = detr_hungarian_cost_matrix(
        logits, pred_boxes, target_ids, target_bbox,
        class_cost=class_cost, bbox_cost=bbox_cost, giou_cost=giou_cost)
    cost = jax.block_until_ready(cost)

    cost_np = np.asarray(cost)
    sizes = [int(t["boxes"].shape[0]) for t in targets]
    indices = []
    offset = 0
    for b, n in enumerate(sizes):
        i, j = _brute_force_lsa(cost_np[b, :, offset:offset + n])
        indices.append((i, j))
        offset += n
    return cost, indices


if __name__ == "__main__":
    key = jax.random.PRNGKey(0)
    B, Q, NC = 2, 8, 32
    n_targets = [3, 4]

    keys = jax.random.split(key, 8)
    logits = jax.random.normal(keys[0], (B, Q, NC), dtype=jnp.float32)

    def rand_boxes(k, n):
        k1, k2 = jax.random.split(k)
        centers = jax.random.uniform(k1, (n, 2), minval=0.25, maxval=0.75)
        sizes = jax.random.uniform(k2, (n, 2), minval=0.05, maxval=0.30)
        return jnp.concatenate([centers, sizes], axis=-1).astype(jnp.float32)

    pred_boxes = rand_boxes(keys[1], B * Q).reshape(B, Q, 4)
    targets = []
    for b in range(B):
        labels = jax.random.randint(keys[2 + 2 * b], (n_targets[b],), 0, NC)
        boxes = rand_boxes(keys[3 + 2 * b], n_targets[b])
        targets.append({"class_labels": labels, "boxes": boxes})

    cost, indices = detr_hungarian_matcher(logits, pred_boxes, targets)
    cost = jax.block_until_ready(cost)

    # ---------------- pure-JAX reference of the cost matrix ----------------
    target_ids = jnp.concatenate([t["class_labels"] for t in targets])
    target_bbox = jnp.concatenate([t["boxes"] for t in targets])
    BQ, T = B * Q, int(target_bbox.shape[0])

    out_prob = jax.nn.softmax(logits.reshape(BQ, NC), axis=-1)
    out_bbox = pred_boxes.reshape(BQ, 4)
    cls_cost_ref = -out_prob[:, target_ids]
    l1_cost_ref = jnp.sum(jnp.abs(out_bbox[:, None, :] - target_bbox[None, :, :]),
                          axis=-1)

    def c2c(bx):
        cx, cy, w, h = bx[..., 0], bx[..., 1], bx[..., 2], bx[..., 3]
        return jnp.stack([cx - 0.5 * w, cy - 0.5 * h,
                          cx + 0.5 * w, cy + 0.5 * h], axis=-1)

    b1, b2 = c2c(out_bbox), c2c(target_bbox)
    area1 = (b1[:, 2] - b1[:, 0]) * (b1[:, 3] - b1[:, 1])
    area2 = (b2[:, 2] - b2[:, 0]) * (b2[:, 3] - b2[:, 1])
    lt = jnp.maximum(b1[:, None, :2], b2[None, :, :2])
    rb = jnp.minimum(b1[:, None, 2:], b2[None, :, 2:])
    wh = jnp.clip(rb - lt, 0.0)
    inter = wh[..., 0] * wh[..., 1]
    union = area1[:, None] + area2[None, :] - inter
    iou = inter / union
    lt_e = jnp.minimum(b1[:, None, :2], b2[None, :, :2])
    rb_e = jnp.maximum(b1[:, None, 2:], b2[None, :, 2:])
    wh_e = jnp.clip(rb_e - lt_e, 0.0)
    area_e = wh_e[..., 0] * wh_e[..., 1]
    giou = iou - (area_e - union) / area_e
    ref_cost = (l1_cost_ref + cls_cost_ref - giou).reshape(B, Q, T)

    assert cost.shape == (B, Q, T)
    assert jnp.allclose(cost, ref_cost, atol=1e-5, rtol=1e-5)
    for (i, j), n in zip(indices, n_targets):
        assert len(i) == len(j) == min(Q, n)
        assert len(set(int(v) for v in i)) == len(i)  # 1-to-1 matching
    print("KERNEL_OK")
</pallas_src>

<mosaic_0001>
module attributes {stable_mosaic.version = 11 : i64} {
  func.func @_matcher_cost_kernel(%arg0: i32, %arg1: memref<8x32xf32, #tpu.memory_space<vmem>>, %arg2: memref<32x128xf32, #tpu.memory_space<vmem>>, %arg3: memref<8x4xf32, #tpu.memory_space<vmem>>, %arg4: memref<4x128xf32, #tpu.memory_space<vmem>>, %arg5: memref<4x128xf32, #tpu.memory_space<vmem>>, %arg6: memref<8x128xf32, #tpu.memory_space<vmem>>) attributes {dimension_semantics = [#tpu.dimension_semantics<parallel>], iteration_bounds = array<i64: 2>, scalar_prefetch = 0 : i64, scratch_operands = 0 : i64, tpu.core_type = #tpu.core_type<tc>, window_params = [{transform_indices = @transform_0, window_bounds = array<i64: 8, 32>}, {pipeline_mode = #tpu.pipeline_mode<synchronous>, transform_indices = @transform_1, window_bounds = array<i64: 32, 128>}, {transform_indices = @transform_2, window_bounds = array<i64: 8, 4>}, {pipeline_mode = #tpu.pipeline_mode<synchronous>, transform_indices = @transform_3, window_bounds = array<i64: 4, 128>}, {pipeline_mode = #tpu.pipeline_mode<synchronous>, transform_indices = @transform_4, window_bounds = array<i64: 4, 128>}, {transform_indices = @transform_5, window_bounds = array<i64: 8, 128>}]} {
    %c0 = arith.constant 0 : index
    %c0_0 = arith.constant 0 : index
    %0 = vector.load %arg1[%c0, %c0_0] : memref<8x32xf32, #tpu.memory_space<vmem>>, vector<8x32xf32>
    %cst = arith.constant dense<0xFF800000> : vector<8xf32>
    %1 = vector.multi_reduction <maximumf>, %0, %cst [1] : vector<8x32xf32> to vector<8xf32>
    %2 = vector.shape_cast %1 : vector<8xf32> to vector<8x1xf32>
    %3 = vector.broadcast %2 : vector<8x1xf32> to vector<8x32xf32>
    %4 = arith.subf %0, %3 : vector<8x32xf32>
    %5 = math.exp %4 : vector<8x32xf32>
    %cst_1 = arith.constant dense<0.000000e+00> : vector<8xf32>
    %6 = vector.multi_reduction <add>, %5, %cst_1 [1] : vector<8x32xf32> to vector<8xf32>
    %7 = vector.shape_cast %6 : vector<8xf32> to vector<8x1xf32>
    %8 = vector.broadcast %7 : vector<8x1xf32> to vector<8x32xf32>
    %9 = arith.divf %5, %8 : vector<8x32xf32>
    %c0_2 = arith.constant 0 : index
    %c0_3 = arith.constant 0 : index
    %10 = vector.load %arg2[%c0_2, %c0_3] : memref<32x128xf32, #tpu.memory_space<vmem>>, vector<32x128xf32>
    %cst_4 = arith.constant dense<0.000000e+00> : vector<8x128xf32>
    %11 = tpu.matmul %9, %10, %cst_4 {dimension_numbers = #tpu.dot_dimension_numbers<[1], [0], [0], [1], [0, 0, 1, 1], [], []>} : vector<8x32xf32>, vector<32x128xf32>, vector<8x128xf32> -> vector<8x128xf32>
    %cst_5 = arith.constant 0.000000e+00 : f32
    %12 = vector.broadcast %cst_5 : f32 to vector<8x128xf32>
    %13 = arith.subf %12, %11 : vector<8x128xf32>
    %c0_6 = arith.constant 0 : index
    %c0_7 = arith.constant 0 : index
    %14 = vector.load %arg3[%c0_6, %c0_7] : memref<8x4xf32, #tpu.memory_space<vmem>>, vector<8x4xf32>
    %15 = vector.extract_strided_slice %14 {offsets = [0, 0], sizes = [8, 1], strides = [1, 1]} : vector<8x4xf32> to vector<8x1xf32>
    %16 = vector.extract_strided_slice %14 {offsets = [0, 1], sizes = [8, 1], strides = [1, 1]} : vector<8x4xf32> to vector<8x1xf32>
    %17 = vector.extract_strided_slice %14 {offsets = [0, 2], sizes = [8, 1], strides = [1, 1]} : vector<8x4xf32> to vector<8x1xf32>
    %18 = vector.extract_strided_slice %14 {offsets = [0, 3], sizes = [8, 1], strides = [1, 1]} : vector<8x4xf32> to vector<8x1xf32>
    %c0_8 = arith.constant 0 : index
    %c0_9 = arith.constant 0 : index
    %19 = vector.load %arg4[%c0_8, %c0_9] : memref<4x128xf32, #tpu.memory_space<vmem>>, vector<4x128xf32>
    %20 = vector.extract_strided_slice %19 {offsets = [0, 0], sizes = [1, 128], strides = [1, 1]} : vector<4x128xf32> to vector<1x128xf32>
    %21 = vector.extract_strided_slice %19 {offsets = [1, 0], sizes = [1, 128], strides = [1, 1]} : vector<4x128xf32> to vector<1x128xf32>
    %22 = vector.extract_strided_slice %19 {offsets = [2, 0], sizes = [1, 128], strides = [1, 1]} : vector<4x128xf32> to vector<1x128xf32>
    %23 = vector.extract_strided_slice %19 {offsets = [3, 0], sizes = [1, 128], strides = [1, 1]} : vector<4x128xf32> to vector<1x128xf32>
    %24 = vector.broadcast %15 : vector<8x1xf32> to vector<8x128xf32>
    %25 = vector.broadcast %20 : vector<1x128xf32> to vector<8x128xf32>
    %26 = arith.subf %24, %25 : vector<8x128xf32>
    %27 = math.absf %26 : vector<8x128xf32>
    %28 = vector.broadcast %16 : vector<8x1xf32> to vector<8x128xf32>
    %29 = vector.broadcast %21 : vector<1x128xf32> to vector<8x128xf32>
    %30 = arith.subf %28, %29 : vector<8x128xf32>
    %31 = math.absf %30 : vector<8x128xf32>
    %32 = arith.addf %27, %31 : vector<8x128xf32>
    %33 = vector.broadcast %17 : vector<8x1xf32> to vector<8x128xf32>
    %34 = vector.broadcast %22 : vector<1x128xf32> to vector<8x128xf32>
    %35 = arith.subf %33, %34 : vector<8x128xf32>
    %36 = math.absf %35 : vector<8x128xf32>
    %37 = arith.addf %32, %36 : vector<8x128xf32>
    %38 = vector.broadcast %18 : vector<8x1xf32> to vector<8x128xf32>
    %39 = vector.broadcast %23 : vector<1x128xf32> to vector<8x128xf32>
    %40 = arith.subf %38, %39 : vector<8x128xf32>
    %41 = math.absf %40 : vector<8x128xf32>
    %42 = arith.addf %37, %41 : vector<8x128xf32>
    %cst_10 = arith.constant 5.000000e-01 : f32
    %43 = vector.broadcast %cst_10 : f32 to vector<8x1xf32>
    %44 = arith.mulf %43, %17 : vector<8x1xf32>
    %45 = arith.subf %15, %44 : vector<8x1xf32>
    %cst_11 = arith.constant 5.000000e-01 : f32
    %46 = vector.broadcast %cst_11 : f32 to vector<8x1xf32>
    %47 = arith.mulf %46, %18 : vector<8x1xf32>
    %48 = arith.subf %16, %47 : vector<8x1xf32>
    %cst_12 = arith.constant 5.000000e-01 : f32
    %49 = vector.broadcast %cst_12 : f32 to vector<8x1xf32>
    %50 = arith.mulf %49, %17 : vector<8x1xf32>
    %51 = arith.addf %15, %50 : vector<8x1xf32>
    %cst_13 = arith.constant 5.000000e-01 : f32
    %52 = vector.broadcast %cst_13 : f32 to vector<8x1xf32>
    %53 = arith.mulf %52, %18 : vector<8x1xf32>
    %54 = arith.addf %16, %53 : vector<8x1xf32>
    %c0_14 = arith.constant 0 : index
    %c0_15 = arith.constant 0 : index
    %55 = vector.load %arg5[%c0_14, %c0_15] : memref<4x128xf32, #tpu.memory_space<vmem>>, vector<4x128xf32>
    %56 = vector.extract_strided_slice %55 {offsets = [0, 0], sizes = [1, 128], strides = [1, 1]} : vector<4x128xf32> to vector<1x128xf32>
    %57 = vector.extract_strided_slice %55 {offsets = [1, 0], sizes = [1, 128], strides = [1, 1]} : vector<4x128xf32> to vector<1x128xf32>
    %58 = vector.extract_strided_slice %55 {offsets = [2, 0], sizes = [1, 128], strides = [1, 1]} : vector<4x128xf32> to vector<1x128xf32>
    %59 = vector.extract_strided_slice %55 {offsets = [3, 0], sizes = [1, 128], strides = [1, 1]} : vector<4x128xf32> to vector<1x128xf32>
    %60 = arith.subf %51, %45 : vector<8x1xf32>
    %61 = arith.subf %54, %48 : vector<8x1xf32>
    %62 = arith.mulf %60, %61 : vector<8x1xf32>
    %63 = arith.subf %58, %56 : vector<1x128xf32>
    %64 = arith.subf %59, %57 : vector<1x128xf32>
    %65 = arith.mulf %63, %64 : vector<1x128xf32>
    %66 = vector.broadcast %51 : vector<8x1xf32> to vector<8x128xf32>
    %67 = vector.broadcast %58 : vector<1x128xf32> to vector<8x128xf32>
    %68 = arith.minimumf %66, %67 : vector<8x128xf32>
    %69 = vector.broadcast %45 : vector<8x1xf32> to vector<8x128xf32>
    %70 = vector.broadcast %56 : vector<1x128xf32> to vector<8x128xf32>
    %71 = arith.maximumf %69, %70 : vector<8x128xf32>
    %72 = arith.subf %68, %71 : vector<8x128xf32>
    %cst_16 = arith.constant 0.000000e+00 : f32
    %73 = vector.broadcast %cst_16 : f32 to vector<8x128xf32>
    %74 = arith.maximumf %72, %73 : vector<8x128xf32>
    %75 = vector.broadcast %54 : vector<8x1xf32> to vector<8x128xf32>
    %76 = vector.broadcast %59 : vector<1x128xf32> to vector<8x128xf32>
    %77 = arith.minimumf %75, %76 : vector<8x128xf32>
    %78 = vector.broadcast %48 : vector<8x1xf32> to vector<8x128xf32>
    %79 = vector.broadcast %57 : vector<1x128xf32> to vector<8x128xf32>
    %80 = arith.maximumf %78, %79 : vector<8x128xf32>
    %81 = arith.subf %77, %80 : vector<8x128xf32>
    %cst_17 = arith.constant 0.000000e+00 : f32
    %82 = vector.broadcast %cst_17 : f32 to vector<8x128xf32>
    %83 = arith.maximumf %81, %82 : vector<8x128xf32>
    %84 = arith.mulf %74, %83 : vector<8x128xf32>
    %85 = vector.broadcast %62 : vector<8x1xf32> to vector<8x128xf32>
    %86 = vector.broadcast %65 : vector<1x128xf32> to vector<8x128xf32>
    %87 = arith.addf %85, %86 : vector<8x128xf32>
    %88 = arith.subf %87, %84 : vector<8x128xf32>
    %89 = arith.divf %84, %88 : vector<8x128xf32>
    %90 = vector.broadcast %51 : vector<8x1xf32> to vector<8x128xf32>
    %91 = vector.broadcast %58 : vector<1x128xf32> to vector<8x128xf32>
    %92 = arith.maximumf %90, %91 : vector<8x128xf32>
    %93 = vector.broadcast %45 : vector<8x1xf32> to vector<8x128xf32>
    %94 = vector.broadcast %56 : vector<1x128xf32> to vector<8x128xf32>
    %95 = arith.minimumf %93, %94 : vector<8x128xf32>
    %96 = arith.subf %92, %95 : vector<8x128xf32>
    %cst_18 = arith.constant 0.000000e+00 : f32
    %97 = vector.broadcast %cst_18 : f32 to vector<8x128xf32>
    %98 = arith.maximumf %96, %97 : vector<8x128xf32>
    %99 = vector.broadcast %54 : vector<8x1xf32> to vector<8x128xf32>
    %100 = vector.broadcast %59 : vector<1x128xf32> to vector<8x128xf32>
    %101 = arith.maximumf %99, %100 : vector<8x128xf32>
    %102 = vector.broadcast %48 : vector<8x1xf32> to vector<8x128xf32>
    %103 = vector.broadcast %57 : vector<1x128xf32> to vector<8x128xf32>
    %104 = arith.minimumf %102, %103 : vector<8x128xf32>
    %105 = arith.subf %101, %104 : vector<8x128xf32>
    %cst_19 = arith.constant 0.000000e+00 : f32
    %106 = vector.broadcast %cst_19 : f32 to vector<8x128xf32>
    %107 = arith.maximumf %105, %106 : vector<8x128xf32>
    %108 = arith.mulf %98, %107 : vector<8x128xf32>
    %109 = arith.subf %108, %88 : vector<8x128xf32>
    %110 = arith.divf %109, %108 : vector<8x128xf32>
    %111 = arith.subf %89, %110 : vector<8x128xf32>
    %cst_20 = arith.constant 0.000000e+00 : f32
    %112 = vector.broadcast %cst_20 : f32 to vector<8x128xf32>
    %113 = arith.subf %112, %111 : vector<8x128xf32>
    %cst_21 = arith.constant 1.000000e+00 : f32
    %114 = vector.broadcast %cst_21 : f32 to vector<8x128xf32>
    %115 = arith.mulf %114, %42 : vector<8x128xf32>
    %cst_22 = arith.constant 1.000000e+00 : f32
    %116 = vector.broadcast %cst_22 : f32 to vector<8x128xf32>
    %117 = arith.mulf %116, %13 : vector<8x128xf32>
    %118 = arith.addf %115, %117 : vector<8x128xf32>
    %cst_23 = arith.constant 1.000000e+00 : f32
    %119 = vector.broadcast %cst_23 : f32 to vector<8x128xf32>
    %120 = arith.mulf %119, %113 : vector<8x128xf32>
    %121 = arith.addf %118, %120 : vector<8x128xf32>
    %c0_24 = arith.constant 0 : index
    %c0_25 = arith.constant 0 : index
    %122 = vector.load %arg6[%c0_24, %c0_25] : memref<8x128xf32, #tpu.memory_space<vmem>>, vector<8x128xf32>
    tpu.vector_store %arg6[%c0_24, %c0_25], %121 {strides = array<i32>} : memref<8x128xf32, #tpu.memory_space<vmem>>, vector<8x128xf32>,
    return
  }
  func.func @transform_0(%arg0: i32) -> (i32, i32) {
    %c0_i32 = arith.constant 0 : i32
    %c0_i32_0 = arith.constant 0 : i32
    return %arg0, %c0_i32 : i32, i32
  }
  func.func @transform_1(%arg0: i32) -> (i32, i32) {
    %c0_i32 = arith.constant 0 : i32
    %c0_i32_0 = arith.constant 0 : i32
    %c0_i32_1 = arith.constant 0 : i32
    return %c0_i32, %c0_i32_0 : i32, i32
  }
  func.func @transform_2(%arg0: i32) -> (i32, i32) {
    %c0_i32 = arith.constant 0 : i32
    %c0_i32_0 = arith.constant 0 : i32
    return %arg0, %c0_i32 : i32, i32
  }
  func.func @transform_3(%arg0: i32) -> (i32, i32) {
    %c0_i32 = arith.constant 0 : i32
    %c0_i32_0 = arith.constant 0 : i32
    %c0_i32_1 = arith.constant 0 : i32
    return %c0_i32, %c0_i32_0 : i32, i32
  }
  func.func @transform_4(%arg0: i32) -> (i32, i32) {
    %c0_i32 = arith.constant 0 : i32
    %c0_i32_0 = arith.constant 0 : i32
    %c0_i32_1 = arith.constant 0 : i32
    return %c0_i32, %c0_i32_0 : i32, i32
  }
  func.func @transform_5(%arg0: i32) -> (i32, i32) {
    %c0_i32 = arith.constant 0 : i32
    %c0_i32_0 = arith.constant 0 : i32
    return %arg0, %c0_i32 : i32, i32
  }
}

</mosaic_0001>

<llo_original>
// kernel: tpu_custom_call.1
$region0: #{tpu_custom_call.1}
  #allocation0 [shape = 'u32[]', space=smem, size = 0x4, offset = 0x4, fixed_abs, tag = 'smem constant byte address 0x4 - core index']
  #allocation1 [shape = 'u32[144,128]{1,0:T(1,128)}', space=vmem, size = 0x12000, scoped, tag = 'internal scratch']
  %s0 = inlined_call_operand.vmem [shape: f32[16,32], index: 0, kind: input, shape index: {}]
  %s1 = inlined_call_operand.hbm [shape: f32[32,128], index: 1, kind: input, shape index: {}]
  %s2 = inlined_call_operand.vmem [shape: f32[16,4], index: 2, kind: input, shape index: {}]
  %s3 = inlined_call_operand.vmem [shape: f32[4,128], index: 3, kind: input, shape index: {}]
  %s4 = inlined_call_operand.vmem [shape: f32[4,128], index: 4, kind: input, shape index: {}]
  %s5 = inlined_call_operand.hbm [shape: f32[16,128], index: 5, kind: output, shape index: {}]
  %s6 = sld [smem:[#allocation0]]
  $region57: #{tpu_custom_call.1} parent=0
    _
  %s8 = ssub.s32 1, %s6
  %s9 = scalar_select 0, %s8, %s6
  $region1: #{tpu_custom_call.1} parent=0
    #allocation2 [shape = 'u8[16384]{0}', space=vmem, size = 0x4000, scoped, tag = 'input window, operand 1, single buffered']
    #allocation3 [shape = 's32[2]{0}', space=sflag, size = 0x8, scoped, tag = 'scoped memory for tpu_custom_call.1']
    #allocation4 [shape = 's32[2]{0}', space=sflag, size = 0x8, scoped, tag = 'scoped memory for tpu_custom_call.1']
    #allocation5 [shape = 'u8[8192]{0}', space=vmem, size = 0x2000, scoped, tag = 'output window, operand 0']
    %10 = vsyncpa [#allocation3], 0
    %11 = vsyncpa [#allocation4], 0
    %s12 = scalar_lea.sflag [#allocation4], 1
    %13 = vsyncpa %s12, 0
    loop: start=0, step=1, limit=4
    $region2: #{tpu_custom_call.1} parent=1 // loop_pre_header
      _
    $region3: #{tpu_custom_call.1} parent=1 // loop_header
      %s15 = sphi 0, %s19
      %p16 = scmp.ge.s32.totalorder %s15, 4
      %s25 = sphi 0, %s27
      %s28 = sphi 0, %s25
      %s29 = sphi 0, %s28
      %s45 = sphi 0, %s29
      %s49 = sphi 0, %s49
      %s51 = sphi 0, %s49
      %s52 = sphi 0, %s51
      %s66 = sphi 0, %s52
      %s72 = sphi 0, %s74
      %s75 = sphi 0, %s72
      %s76 = sphi 0, %s75
      %s92 = sphi 0, %s76
      %s96 = sphi 0, %s96
      %s98 = sphi 0, %s96
      %s99 = sphi 0, %s98
      %s113 = sphi 0, %s99
      %s117 = sphi 0, %s117
      %s119 = sphi 0, %s117
      %s120 = sphi 0, %s119
      %s134 = sphi 0, %s120
      %s140 = sphi 0, %s142
      %s143 = sphi 0, %s140
      %s144 = sphi 0, %s143
      %s160 = sphi 0, %s144
    $region4: #{tpu_custom_call.1} parent=1 // loop_header_branch
      %18 = sbr.rel (%p16) target = $region8
    $region5: #{tpu_custom_call.1} parent=1 // loop_body
      %s20 = ssub.s32 %s15, 1
      %s21 = ssub.s32 %s15, 2
      %s22 = sadd.s32 %s15, 1
      %s23 = ssub.s32 %s15, %s22
      %p24 = scmp.eq.s32.totalorder %s23, 0
      %s26 = sadd.s32 %s25, 1
      %s27 = scalar_select %p24, %s25, %s26
      %p30 = pneg %p24
      %p31 = scmp.eq.s32.totalorder %s15, 1
      %p32 = por %p30, %p31
      %p33 = scmp.ne.s32.totalorder %s25, %s28
      %p34 = scmp.eq.s32.totalorder %s15, 0
      %p35 = por %p33, %p34
      %p36 = scmp.ne.s32.totalorder %s25, %s28
      %p37 = scmp.eq.s32.totalorder %s20, 1
      %p38 = por %p36, %p37
      %p39 = scmp.ne.s32.totalorder %s28, %s29
      %p40 = scmp.eq.s32.totalorder %s20, 0
      %p41 = por %p39, %p40
      %p42 = scmp.ne.s32.totalorder %s28, %s29
      %p43 = scmp.eq.s32.totalorder %s21, 1
      %p44 = por %p42, %p43
      %p46 = scmp.ne.s32.totalorder %s29, %s45
      %p47 = scmp.eq.s32.totalorder %s21, 0
      %p48 = por %p46, %p47
      %s50 = sadd.s32 %s49, 1
      %p53 = scmp.eq.s32.totalorder %s15, 1
      %p54 = scmp.ne.s32.totalorder %s49, %s51
      %p55 = scmp.eq.s32.totalorder %s15, 0
      %p56 = por %p54, %p55
      %p57 = scmp.ne.s32.totalorder %s49, %s51
      %p58 = scmp.eq.s32.totalorder %s20, 1
      %p59 = por %p57, %p58
      %p60 = scmp.ne.s32.totalorder %s51, %s52
      %p61 = scmp.eq.s32.totalorder %s20, 0
      %p62 = por %p60, %p61
      %p63 = scmp.ne.s32.totalorder %s51, %s52
      %p64 = scmp.eq.s32.totalorder %s21, 1
      %p65 = por %p63, %p64
      %p67 = scmp.ne.s32.totalorder %s52, %s66
      %p68 = scmp.eq.s32.totalorder %s21, 0
      %p69 = por %p67, %p68
      %s70 = ssub.s32 %s15, %s22
      %p71 = scmp.eq.s32.totalorder %s70, 0
      %s73 = sadd.s32 %s72, 1
      %s74 = scalar_select %p71, %s72, %s73
      %p77 = pneg %p71
      %p78 = scmp.eq.s32.totalorder %s15, 1
      %p79 = por %p77, %p78
      %p80 = scmp.ne.s32.totalorder %s72, %s75
      %p81 = scmp.eq.s32.totalorder %s15, 0
      %p82 = por %p80, %p81
      %p83 = scmp.ne.s32.totalorder %s72, %s75
      %p84 = scmp.eq.s32.totalorder %s20, 1
      %p85 = por %p83, %p84
      %p86 = scmp.ne.s32.totalorder %s75, %s76
      %p87 = scmp.eq.s32.totalorder %s20, 0
      %p88 = por %p86, %p87
      %p89 = scmp.ne.s32.totalorder %s75, %s76
      %p90 = scmp.eq.s32.totalorder %s21, 1
      %p91 = por %p89, %p90
      %p93 = scmp.ne.s32.totalorder %s76, %s92
      %p94 = scmp.eq.s32.totalorder %s21, 0
      %p95 = por %p93, %p94
      %s97 = sadd.s32 %s96, 1
      %p100 = scmp.eq.s32.totalorder %s15, 1
      %p101 = scmp.ne.s32.totalorder %s96, %s98
      %p102 = scmp.eq.s32.totalorder %s15, 0
      %p103 = por %p101, %p102
      %p104 = scmp.ne.s32.totalorder %s96, %s98
      %p105 = scmp.eq.s32.totalorder %s20, 1
      %p106 = por %p104, %p105
      %p107 = scmp.ne.s32.totalorder %s98, %s99
      %p108 = scmp.eq.s32.totalorder %s20, 0
      %p109 = por %p107, %p108
      %p110 = scmp.ne.s32.totalorder %s98, %s99
      %p111 = scmp.eq.s32.totalorder %s21, 1
      %p112 = por %p110, %p111
      %p114 = scmp.ne.s32.totalorder %s99, %s113
      %p115 = scmp.eq.s32.totalorder %s21, 0
      %p116 = por %p114, %p115
      %s118 = sadd.s32 %s117, 1
      %p121 = scmp.eq.s32.totalorder %s15, 1
      %p122 = scmp.ne.s32.totalorder %s117, %s119
      %p123 = scmp.eq.s32.totalorder %s15, 0
      %p124 = por %p122, %p123
      %p125 = scmp.ne.s32.totalorder %s117, %s119
      %p126 = scmp.eq.s32.totalorder %s20, 1
      %p127 = por %p125, %p126
      %p128 = scmp.ne.s32.totalorder %s119, %s120
      %p129 = scmp.eq.s32.totalorder %s20, 0
      %p130 = por %p128, %p129
      %p131 = scmp.ne.s32.totalorder %s119, %s120
      %p132 = scmp.eq.s32.totalorder %s21, 1
      %p133 = por %p131, %p132
      %p135 = scmp.ne.s32.totalorder %s120, %s134
      %p136 = scmp.eq.s32.totalorder %s21, 0
      %p137 = por %p135, %p136
      %s138 = ssub.s32 %s15, %s22
      %p139 = scmp.eq.s32.totalorder %s138, 0
      %s141 = sadd.s32 %s140, 1
      %s142 = scalar_select %p139, %s140, %s141
      %p145 = pneg %p139
      %p146 = scmp.eq.s32.totalorder %s15, 1
      %p147 = por %p145, %p146
      %p148 = scmp.ne.s32.totalorder %s140, %s143
      %p149 = scmp.eq.s32.totalorder %s15, 0
      %p150 = por %p148, %p149
      %p151 = scmp.ne.s32.totalorder %s140, %s143
      %p152 = scmp.eq.s32.totalorder %s20, 1
      %p153 = por %p151, %p152
      %p154 = scmp.ne.s32.totalorder %s143, %s144
      %p155 = scmp.eq.s32.totalorder %s20, 0
      %p156 = por %p154, %p155
      %p157 = scmp.ne.s32.totalorder %s143, %s144
      %p158 = scmp.eq.s32.totalorder %s21, 1
      %p159 = por %p157, %p158
      %p161 = scmp.ne.s32.totalorder %s144, %s160
      %p162 = scmp.eq.s32.totalorder %s21, 0
      %p163 = por %p161, %p162
      %p164 = scmp.le.s32.totalorder 1, %s15
      %p165 = scmp.lt.s32.totalorder %s15, 3
      %p166 = pnand %p164, %p165
      %p167 = pneg %p166
      // Predicated region
      $region9: #{tpu_custom_call.1} parent=5 // pred_check
        _
      $region10: #{tpu_custom_call.1} parent=5 // pred_check_branch
        %169 = sbr.rel (%p166) target = $region12
      $region11: #{tpu_custom_call.1} parent=5 // pred_region
        %s170 = ssub.s32 %s15, 1
        // Predicated region
        $region13: #{tpu_custom_call.1} parent=11 // pred_check
          %p171 = pneg %p62
        $region14: #{tpu_custom_call.1} parent=11 // pred_check_branch
          %173 = sbr.rel (%p171) target = $region16
        $region15: #{tpu_custom_call.1} parent=11 // pred_region
          %s175 = ssub.s32 512, 512
          %176 = vsyncadd [#allocation3], %s175
          %s177 = sshll.u32 [#allocation2], 4
          %s178 = int_to_ptr.vmem [resolvable:$true] %s177
          %183 = dma.hbm_to_vmem [thread:$0]  %s1, 512, %s178, [#allocation3], 128, 128, 8
        $region16: #{tpu_custom_call.1} parent=11 // pred_fallthru
          _
        // Predicated region
        $region17: #{tpu_custom_call.1} parent=11 // pred_check
          %p184 = pneg %p109
        $region18: #{tpu_custom_call.1} parent=11 // pred_check_branch
          %186 = sbr.rel (%p184) target = $region20
        $region19: #{tpu_custom_call.1} parent=11 // pred_region
          _
        $region20: #{tpu_custom_call.1} parent=11 // pred_fallthru
          _
        // Predicated region
        $region21: #{tpu_custom_call.1} parent=11 // pred_check
          %p187 = pneg %p130
        $region22: #{tpu_custom_call.1} parent=11 // pred_check_branch
          %189 = sbr.rel (%p187) target = $region24
        $region23: #{tpu_custom_call.1} parent=11 // pred_region
          _
        $region24: #{tpu_custom_call.1} parent=11 // pred_fallthru
          _
      $region12: #{tpu_custom_call.1} parent=5 // pred_fallthru
        _
      %p190 = scmp.lt.s32.totalorder %s15, 2
      // Predicated region
      $region25: #{tpu_custom_call.1} parent=5 // pred_check
        %p191 = pneg %p190
      $region26: #{tpu_custom_call.1} parent=5 // pred_check_branch
        %193 = sbr.rel (%p191) target = $region28
      $region27: #{tpu_custom_call.1} parent=5 // pred_region
        // Predicated region
        $region29: #{tpu_custom_call.1} parent=27 // pred_check
          %p194 = pneg %p35
        $region30: #{tpu_custom_call.1} parent=27 // pred_check_branch
          %196 = sbr.rel (%p194) target = $region32
        $region31: #{tpu_custom_call.1} parent=27 // pred_region
          %p197 = scmp.lt.s32.totalorder %s15, 1
          %s198 = scalar_select %p197, %s15, 1
          %s199 = smul.addr %s198, 8
          %s200 = scalar_lea.vmem %s0, %s199
        $region32: #{tpu_custom_call.1} parent=27 // pred_fallthru
          _
        // Predicated region
        $region33: #{tpu_custom_call.1} parent=27 // pred_check
          %p201 = pneg %p82
        $region34: #{tpu_custom_call.1} parent=27 // pred_check_branch
          %203 = sbr.rel (%p201) target = $region36
        $region35: #{tpu_custom_call.1} parent=27 // pred_region
          %p204 = scmp.lt.s32.totalorder %s15, 1
          %s205 = scalar_select %p204, %s15, 1
          %s206 = smul.addr %s205, 8
          %s207 = scalar_lea.vmem %s2, %s206
        $region36: #{tpu_custom_call.1} parent=27 // pred_fallthru
          _
      $region28: #{tpu_custom_call.1} parent=5 // pred_fallthru
        _
      %p208 = scmp.le.s32.totalorder 1, %s15
      %p209 = scmp.lt.s32.totalorder %s15, 3
      %p210 = pnand %p208, %p209
      %p211 = pneg %p210
      // Predicated region
      $region37: #{tpu_custom_call.1} parent=5 // pred_check
        _
      $region38: #{tpu_custom_call.1} parent=5 // pred_check_branch
        %213 = sbr.rel (%p210) target = $region40
      $region39: #{tpu_custom_call.1} parent=5 // pred_region
        %s214 = ssub.s32 %s15, 1
        // Predicated region
        $region41: #{tpu_custom_call.1} parent=39 // pred_check
          %p215 = pneg %p62
        $region42: #{tpu_custom_call.1} parent=39 // pred_check_branch
          %217 = sbr.rel (%p215) target = $region44
        $region43: #{tpu_custom_call.1} parent=39 // pred_region
          %218 = dma.done [#allocation3], 512
        $region44: #{tpu_custom_call.1} parent=39 // pred_fallthru
          _
        %p219 = scmp.lt.s32.totalorder %s20, 1
        %s220 = scalar_select %p219, %s20, 1
        %s221 = smul.addr %s220, 8
        %s222 = scalar_lea.vmem %s0, %s221
        %p223 = pneg %p41
        %p224 = pneg %p38
        %p225 = pneg %p62
        %p226 = pneg %p59
        %p227 = scmp.lt.s32.totalorder %s20, 1
        %s228 = scalar_select %p227, %s20, 1
        %s229 = smul.addr %s228, 8
        %s230 = scalar_lea.vmem %s2, %s229
        %p231 = pneg %p88
        %p232 = pneg %p85
        %p233 = pneg %p109
        %p234 = pneg %p106
        %p235 = pneg %p130
        %p236 = pneg %p127
        %p237 = pneg %p156
        %p238 = pneg %p153
        %s239 = sand.u32 %s143, 1
        %s240 = scalar_lea.sflag [#allocation4], %s239
        %s241 = sand.u32 %s143, 1
        %s242 = smul.addr %s241, 8
        %s243 = scalar_lea.vmem [#allocation5], %s242
        %p244 = scmp.lt.s32.totalorder %s20, 1
        %s245 = scalar_select %p244, %s20, 1
        %s246 = smul.addr %s245, 8
        %s247 = scalar_lea.vmem %s0, %s246
        %p248 = scmp.lt.s32.totalorder %s20, 1
        %s249 = scalar_select %p248, %s20, 1
        %s250 = smul.addr %s249, 8
        %s251 = scalar_lea.vmem %s2, %s250
        %v252 = vld [vmem:[%s247] sm:$0xff]
        %vm253 = vcmask 261120
        %v254 = vsel %vm253, %v252, -inf
        %255 = vmax.xlane.f32.xlu0 %v254
        %v256 = vpop.xlane.xlu0 %255
        %v257 = vsub.f32 %v252, %v256
        %v258 = vmul.f32 %v257, 1.442695
        %v259 = vpow.pop %v258
        %v260 = vsel %vm253, %v259, 0.0
        %261 = vadd.xlane.f32.xlu0 %v260
        %v262 = vpop.xlane.xlu0 %261
        %v263 = vrcp.pop %v262
        %v264 = vmul.f32 %v259, %v263
        %v265 = vld [vmem:[#allocation2] sm:$0xff]
        %v266 = vld [vmem:[#allocation2 + $0x8] sm:$0xff]
        %v267 = vld [vmem:[#allocation2 + $0x10] sm:$0xff]
        %v268 = vld [vmem:[#allocation2 + $0x18] sm:$0xff]
        %v270 = vsel %vm253, %v264, 0
        %272 = vmatprep.subr.mxu0 0.0
        %273 = vmatpush1.msra.mxu0 0.0
        %274 = vmatprep.subr.mxu0 0.0
        %275 = vmatpush1.msra.mxu0 0.0
        %276 = vmatprep.subr.mxu0 0.0
        %277 = vmatpush1.msra.mxu0 0.0
        %278 = vmatprep.subr.mxu0 0.0
        %279 = vmatpush1.msra.mxu0 0.0
        %280 = vmatprep.subr.mxu0 0.0
        %281 = vmatpush1.msra.mxu0 0.0
        %282 = vmatprep.subr.mxu0 0.0
        %283 = vmatpush1.msra.mxu0 0.0
        %284 = vmatprep.subr.mxu0 0.0
        %285 = vmatpush1.msra.mxu0 0.0
        %286 = vmatprep.subr.mxu0 0.0
        %287 = vmatpush1.msra.mxu0 0.0
        %288 = vmatprep.subr.mxu0 0.0
        %289 = vmatpush1.msra.mxu0 0.0
        %290 = vmatprep.subr.mxu0 0.0
        %291 = vmatpush1.msra.mxu0 0.0
        %292 = vmatprep.subr.mxu0 0.0
        %293 = vmatpush1.msra.mxu0 0.0
        %294 = vmatprep.subr.mxu0 0.0
        %295 = vmatpush1.msra.mxu0 0.0
        %296 = vmatprep.subr.mxu0 0.0
        %297 = vmatpush1.msra.mxu0 %v268
        %298 = vmatprep.subr.mxu0 0.0
        %299 = vmatpush1.msra.mxu0 %v267
        %300 = vmatprep.subr.mxu0 0.0
        %301 = vmatpush1.msra.mxu0 %v266
        %302 = vmatprep.subr.mxu0 0.0
        %303 = vmatpush1.msra.mxu0 %v265
        %304 = vmatprep.subr.mxu0 0.0
        %305 = vmatpush2.msra.mxu0 0.0
        %306 = vmatprep.subr.mxu0 0.0
        %307 = vmatpush2.msra.mxu0 0.0
        %308 = vmatprep.subr.mxu0 0.0
        %309 = vmatpush2.msra.mxu0 0.0
        %310 = vmatprep.subr.mxu0 0.0
        %311 = vmatpush2.msra.mxu0 0.0
        %312 = vmatprep.subr.mxu0 0.0
        %313 = vmatpush2.msra.mxu0 0.0
        %314 = vmatprep.subr.mxu0 0.0
        %315 = vmatpush2.msra.mxu0 0.0
        %316 = vmatprep.subr.mxu0 0.0
        %317 = vmatpush2.msra.mxu0 0.0
        %318 = vmatprep.subr.mxu0 0.0
        %319 = vmatpush2.msra.mxu0 0.0
        %320 = vmatprep.subr.mxu0 0.0
        %321 = vmatpush2.msra.mxu0 0.0
        %322 = vmatprep.subr.mxu0 0.0
        %323 = vmatpush2.msra.mxu0 0.0
        %324 = vmatprep.subr.mxu0 0.0
        %325 = vmatpush2.msra.mxu0 0.0
        %326 = vmatprep.subr.mxu0 0.0
        %327 = vmatpush2.msra.mxu0 0.0
        %328 = vmatprep.subr.mxu0 0.0
        %329 = vmatpush2.msra.mxu0 0.0
        %330 = vmatprep.subr.mxu0 0.0
        %331 = vmatpush2.msra.mxu0 0.0
        %332 = vmatprep.subr.mxu0 0.0
        %333 = vmatpush2.msra.mxu0 0.0
        %334 = vmatprep.subr.mxu0 0.0
        %335 = vmatpush2.msra.mxu0 0.0
        %336 = vmatprep.mubr.f32.mxu0 0.0
        %337 = vmatmul.mubr.f32.gmra.mxu0 %v270
        %v338 = vpop.f32.mrf.mxu0
        %v339 = vadd.f32 0.0, %v338
        %v340 = vpop.f32.mrf.mxu0
        %341 = vdwg.mxu0
        %v342 = vsub.f32 0.0, %v339
        %v343 = vld [vmem:[%s251] sm:$0xff]
        %v344 = vld [vmem:[%s3] sm:$0xf]
        %346 = vset.pattern.permute.xlu0 0
        %347 = vperm.xlu0 %346, %v343
        %v348 = vpop.permute.xlu0 %347
        %v350 = vlaneseq
        %v351 = vshrl.u32 %v350, 7
        %v352 = vsub.s32 0, %v351
        %v353 = vrot.slane %v344, %v352
        %v354 = vsub.f32 %v348, %v353
        %v355 = vand.u32 2147483647, %v354
        %356 = vset.pattern.permute.xlu0 1
        %357 = vperm.xlu0 %356, %v343
        %v358 = vpop.permute.xlu0 %357
        %v360 = vlaneseq
        %v361 = vshrl.u32 %v360, 7
        %v362 = vsub.s32 1, %v361
        %v363 = vrot.slane %v344, %v362
        %v364 = vsub.f32 %v358, %v363
        %v365 = vand.u32 2147483647, %v364
        %v366 = vadd.f32 %v355, %v365
        %367 = vset.pattern.permute.xlu0 2
        %368 = vperm.xlu0 %367, %v343
        %v369 = vpop.permute.xlu0 %368
        %v371 = vlaneseq
        %v372 = vshrl.u32 %v371, 7
        %v373 = vsub.s32 2, %v372
        %v374 = vrot.slane %v344, %v373
        %v375 = vsub.f32 %v369, %v374
        %v376 = vand.u32 2147483647, %v375
        %v377 = vadd.f32 %v366, %v376
        %378 = vset.pattern.permute.xlu0 3
        %379 = vperm.xlu0 %378, %v343
        %v380 = vpop.permute.xlu0 %379
        %v382 = vlaneseq
        %v383 = vshrl.u32 %v382, 7
        %v384 = vsub.s32 3, %v383
        %v385 = vrot.slane %v344, %v384
        %v386 = vsub.f32 %v380, %v385
        %v387 = vand.u32 2147483647, %v386
        %v388 = vadd.f32 %v377, %v387
        %v389 = vmul.f32 %v343, 0.5
        %391 = vrot.lane.b32.xlu0 %v389, 126
        %v392 = vpop.permute.xlu0 %391
        %v394 = vsub.f32 %v343, %v392
        %v395 = vadd.f32 %v343, %v392
        %v396 = vld [vmem:[%s4] sm:$0xf]
        %v397 = vsub.f32 %v395, %v394
        %399 = vrot.lane.b32.xlu0 %v397, 127
        %v400 = vpop.permute.xlu0 %399
        %v402 = vmul.f32 %v397, %v400
        %v404 = vrot.slane %v396, 6
        %v406 = vsub.f32 %v396, %v404
        %v408 = vrot.slane %v406, 1
        %v410 = vmul.f32 %v406, %v408
        %412 = vset.pattern.permute.xlu0 0
        %413 = vperm.xlu0 %412, %v395
        %v414 = vpop.permute.xlu0 %413
        %v416 = vlaneseq
        %v417 = vshrl.u32 %v416, 7
        %v418 = vsub.s32 2, %v417
        %v419 = vrot.slane %v396, %v418
        %v420 = vmin.f32 %v414, %v419
        %422 = vset.pattern.permute.xlu0 0
        %423 = vperm.xlu0 %422, %v394
        %v424 = vpop.permute.xlu0 %423
        %v426 = vlaneseq
        %v427 = vshrl.u32 %v426, 7
        %v428 = vsub.s32 0, %v427
        %v429 = vrot.slane %v396, %v428
        %v430 = vmax.f32 %v424, %v429
        %v431 = vsub.f32 %v420, %v430
        %v432 = vmax.f32 %v431, 0.0
        %433 = vset.pattern.permute.xlu0 1
        %434 = vperm.xlu0 %433, %v395
        %v435 = vpop.permute.xlu0 %434
        %v437 = vlaneseq
        %v438 = vshrl.u32 %v437, 7
        %v439 = vsub.s32 3, %v438
        %v440 = vrot.slane %v396, %v439
        %v441 = vmin.f32 %v435, %v440
        %442 = vset.pattern.permute.xlu0 1
        %443 = vperm.xlu0 %442, %v394
        %v444 = vpop.permute.xlu0 %443
        %v446 = vlaneseq
        %v447 = vshrl.u32 %v446, 7
        %v448 = vsub.s32 1, %v447
        %v449 = vrot.slane %v396, %v448
        %v450 = vmax.f32 %v444, %v449
        %v451 = vsub.f32 %v441, %v450
        %v452 = vmax.f32 %v451, 0.0
        %v453 = vmul.f32 %v432, %v452
        %455 = vset.pattern.permute.xlu0 0
        %456 = vperm.xlu0 %455, %v402
        %v457 = vpop.permute.xlu0 %456
        %v459 = vlaneseq
        %v460 = vshrl.u32 %v459, 7
        %v461 = vsub.s32 2, %v460
        %v462 = vrot.slane %v410, %v461
        %v463 = vadd.f32 %v457, %v462
        %v464 = vsub.f32 %v463, %v453
        %v465 = vrcp.pop %v464
        %v466 = vmul.f32 %v453, %v465
        %v467 = vmax.f32 %v414, %v419
        %v468 = vmin.f32 %v424, %v429
        %v469 = vsub.f32 %v467, %v468
        %v470 = vmax.f32 %v469, 0.0
        %v471 = vmax.f32 %v435, %v440
        %v472 = vmin.f32 %v444, %v449
        %v473 = vsub.f32 %v471, %v472
        %v474 = vmax.f32 %v473, 0.0
        %v475 = vmul.f32 %v470, %v474
        %v476 = vsub.f32 %v475, %v464
        %v477 = vrcp.pop %v475
        %v478 = vmul.f32 %v476, %v477
        %v479 = vsub.f32 %v466, %v478
        %v480 = vsub.f32 0.0, %v479
        %v481 = vadd.f32 %v388, %v342
        %v482 = vadd.f32 %v481, %v480
        %483 = vst [vmem:[%s243] sm:$0xff] %v482
        %s484 = sand.u32 %s143, 1
        %s485 = scalar_lea.sflag [#allocation4], %s484
        %s486 = sand.u32 %s143, 1
        %s487 = smul.addr %s486, 8
        %s488 = scalar_lea.vmem [#allocation5], %s487
        // Predicated region
        $region45: #{tpu_custom_call.1} parent=39 // pred_check
          %p489 = pneg %p153
        $region46: #{tpu_custom_call.1} parent=39 // pred_check_branch
          %491 = sbr.rel (%p489) target = $region48
        $region47: #{tpu_custom_call.1} parent=39 // pred_region
          %s493 = ssub.s32 128, 128
          %494 = vsyncadd %s485, %s493
          %s495 = smul.addr %s20, 128
          %s496 = scalar_lea.hbm %s5, %s495
          %s498 = sshll.u32 %s488, 4
          %s499 = int_to_ptr.vmem [resolvable:$true] %s498
          %501 = dma.vmem_to_hbm [thread:$0]  %s499, 128, %s496, %s485
        $region48: #{tpu_custom_call.1} parent=39 // pred_fallthru
          _
      $region40: #{tpu_custom_call.1} parent=5 // pred_fallthru
        _
      %p502 = scmp.le.s32.totalorder 2, %s15
      // Predicated region
      $region49: #{tpu_custom_call.1} parent=5 // pred_check
        %p503 = pneg %p502
      $region50: #{tpu_custom_call.1} parent=5 // pred_check_branch
        %505 = sbr.rel (%p503) target = $region52
      $region51: #{tpu_custom_call.1} parent=5 // pred_region
        %s506 = ssub.s32 %s15, 2
        // Predicated region
        $region53: #{tpu_custom_call.1} parent=51 // pred_check
          %p507 = pneg %p159
        $region54: #{tpu_custom_call.1} parent=51 // pred_check_branch
          %509 = sbr.rel (%p507) target = $region56
        $region55: #{tpu_custom_call.1} parent=51 // pred_region
          %s510 = sand.u32 %s144, 1
          %s511 = scalar_lea.sflag [#allocation4], %s510
          %s512 = sand.u32 %s144, 1
          %s513 = smul.addr %s512, 8
          %s514 = scalar_lea.vmem [#allocation5], %s513
          %515 = dma.done %s511, 128
        $region56: #{tpu_custom_call.1} parent=51 // pred_fallthru
          _
      $region52: #{tpu_custom_call.1} parent=5 // pred_fallthru
        _
    $region6: #{tpu_custom_call.1} parent=1 // loop_footer
      %s19 = sadd.s32 1, %s15
    $region7: #{tpu_custom_call.1} parent=1 // loop_footer_branch
      %14 = sbr.rel target = $region3
    $region8: #{tpu_custom_call.1} parent=1 // loop_exit
      _
    %516 = vsyncpa [#allocation3], 1
    %s517 = scalar_lea.sflag [#allocation3], 1
    %518 = vsyncpa %s517, 1
    %519 = vsyncpa [#allocation4], 1
    %s520 = scalar_lea.sflag [#allocation4], 1
    %521 = vsyncpa %s520, 1

</llo_original>
